<compile_context>
chip_gen: v7x
topology: tpu7x:2x2x1
jax: 0.10.0
libtpu: 0.0.40
codegen_flags: <defaults>
</compile_context>

<pallas_src>
import numpy as np
import jax
import jax.numpy as jnp
from jax.experimental import pallas as pl
from jax.experimental.pallas import tpu as pltpu


def _spatial_softmax_kernel(temp_ref, feat_ref, pos_ref, out_ref):
    # temp_ref: (1,)      f32 in SMEM (temperature; Parameter(ones(1)) -> 1.0)
    # feat_ref: (tm, HW)  native-dtype feature row tile in VMEM
    # pos_ref : (HW, 128) f32 in VMEM, resident across grid steps:
    #           col 0 = pos_x, col 1 = pos_y, col 2 = 1.0, cols 3..127 = 0
    # out_ref : (tm, 2)   f32 in VMEM  [expected_x, expected_y]
    inv_t = 1.0 / temp_ref[0]                          # one scalar reciprocal
    x = feat_ref[...]
    # Row max on the native-dtype tile (exact), then one fused pass that casts,
    # shifts and scales inside the exp argument.
    # TODO(synk): folding 1/T into the exponent assumes temperature > 0 (true
    # for the module's Parameter(torch.ones(1)) initialization).
    m = jnp.max(x, axis=-1, keepdims=True).astype(jnp.float32)
    e = jnp.exp((x.astype(jnp.float32) - m) * inv_t)   # (tm, HW) f32, <= 1
    # One MXU matmul replaces sum(e), sum(e*pos_x), sum(e*pos_y): the
    # unnormalized expectations land in columns 0/1, the denominator in col 2.
    # Keep f32 operands + f32 accumulation (do NOT downcast e to bf16).
    r = jnp.dot(e, pos_ref[...], preferred_element_type=jnp.float32)  # (tm,128)
    inv_denom = pl.reciprocal(r[:, 2:3])               # exact, (tm, 1)
    out_ref[...] = r[:, 0:2] * inv_denom               # deferred normalization


def spatial_softmax(feature, pos_x, pos_y, temperature, *, block_rows=None):
    """feature: (N, C, H, W). pos_x/pos_y: flat (H*W,) f32. temperature: (1,) f32."""
    N, C, H, W = feature.shape
    HW = H * W
    rows = N * C
    # Keep native dtype for the DMA (bf16 inputs read half the HBM bytes);
    # the kernel upcasts to f32 before exp.  reshape is a free view.
    feat2d = feature.reshape(rows, HW)
    itemsize = feat2d.dtype.itemsize

    # Packed position matrix (HW, 128) f32: [pos_x | pos_y | ones | zeros].
    # Tiny (HW * 512 B); constant index_map keeps it resident in VMEM.
    pos_mat = jnp.zeros((HW, 128), jnp.float32)
    pos_mat = pos_mat.at[:, 0].set(jnp.asarray(pos_x, jnp.float32).reshape(HW))
    pos_mat = pos_mat.at[:, 1].set(jnp.asarray(pos_y, jnp.float32).reshape(HW))
    pos_mat = pos_mat.at[:, 2].set(1.0)

    # Sublane packing granularity of the input dtype (8 f32 / 16 bf16 / 32 i8).
    sub = max(8, 32 // itemsize)

    if block_rows is None:
        # Size the tile by its f32 working set (exp/probs are f32 in-kernel):
        # ~6 MiB/tile keeps {double-buffered input + f32 temporaries + the
        # (tm, 128) MXU result} comfortably under the 48 MiB VMEM limit even on
        # v7x (64 MiB physical); v5e/v6e (128 MiB) have ample headroom.  Past a
        # few MiB per tile the kernel sits on the HBM roofline anyway.
        f32_budget = 6 * 1024 * 1024
        tm = f32_budget // (HW * 4)
    else:
        tm = block_rows
    tm = max(sub, (tm // sub) * sub)
    # Keep >= 2 grid steps so dimension_semantics=("parallel",) can feed both
    # v7x TensorCores (no-op on single-core v5e/v6e; extra step cost ~0.35 us).
    half_rows = pl.cdiv(pl.cdiv(rows, 2), sub) * sub
    tm = min(tm, max(sub, half_rows))
    if rows <= sub:
        tm = rows                       # single full-extent block for tiny inputs
    num_tiles = pl.cdiv(rows, tm)       # ragged last block is masked by Pallas

    out = pl.pallas_call(
        _spatial_softmax_kernel,
        out_shape=jax.ShapeDtypeStruct((rows, 2), jnp.float32),
        grid=(num_tiles,),
        in_specs=[
            pl.BlockSpec(memory_space=pltpu.SMEM),        # temperature scalar
            pl.BlockSpec((tm, HW), lambda i: (i, 0)),     # feature row tile
            pl.BlockSpec((HW, 128), lambda i: (0, 0)),    # packed pos (resident)
        ],
        out_specs=pl.BlockSpec((tm, 2), lambda i: (i, 0)),
        compiler_params=pltpu.CompilerParams(
            dimension_semantics=("parallel",),            # 2 TCs on v7x
            vmem_limit_bytes=48 * 1024 * 1024,
        ),
    )(temperature, feat2d, pos_mat)

    # torch: expected_xy.view(-1, channel*2) -> per-sample [x_c0, y_c0, x_c1, ...]
    return out.reshape(N, C * 2)


def _make_pos(height, width):
    # Mirrors the PyTorch __init__ buffer construction exactly (including the
    # meshgrid(height, width) 'xy' argument order of the reference module; for
    # H != W this matches the module as written, not the usual convention).
    pos_x, pos_y = np.meshgrid(np.linspace(-1.0, 1.0, height),
                               np.linspace(-1.0, 1.0, width))
    pos_x = pos_x.reshape(height * width).astype(np.float32)
    pos_y = pos_y.reshape(height * width).astype(np.float32)
    return jnp.asarray(pos_x), jnp.asarray(pos_y)


def _reference(feature, pos_x, pos_y, temperature):
    N, C, H, W = feature.shape
    f = feature.reshape(N * C, H * W).astype(jnp.float32) / temperature[0]
    p = jax.nn.softmax(f, axis=-1)
    ex = jnp.sum(p * pos_x.reshape(1, -1), axis=-1, keepdims=True)
    ey = jnp.sum(p * pos_y.reshape(1, -1), axis=-1, keepdims=True)
    return jnp.concatenate([ex, ey], axis=1).reshape(N, C * 2)


if __name__ == "__main__":
    # Primary small example: batch=2, channel=4, 16x16 spatial map.
    N, C, H, W = 2, 4, 16, 16
    key = jax.random.PRNGKey(0)
    x = jax.random.normal(key, (N, C, H, W), dtype=jnp.float32)

    pos_x, pos_y = _make_pos(H, W)
    # temperature=None in __init__ -> Parameter(torch.ones(1)) -> 1.0
    temperature = jnp.ones((1,), dtype=jnp.float32)

    out = spatial_softmax(x, pos_x, pos_y, temperature)
    out = jax.block_until_ready(out)
    ref = _reference(x, pos_x, pos_y, temperature)
    np.testing.assert_allclose(np.asarray(out), np.asarray(ref),
                               rtol=1e-5, atol=1e-5)
    assert out.shape == (N, 2 * C)

    # Second check: exercises the multi-tile grid and the ragged (unpadded)
    # last block path (rows = N*C = 15 is not a multiple of the 8-row tile).
    N2, C2 = 3, 5
    x2 = jax.random.normal(jax.random.PRNGKey(1), (N2, C2, H, W),
                           dtype=jnp.float32)
    out2 = jax.block_until_ready(spatial_softmax(x2, pos_x, pos_y, temperature))
    ref2 = _reference(x2, pos_x, pos_y, temperature)
    np.testing.assert_allclose(np.asarray(out2), np.asarray(ref2),
                               rtol=1e-5, atol=1e-5)

    print("KERNEL_OK")
</pallas_src>

<mosaic_0001>
module attributes {stable_mosaic.version = 11 : i64} {
  func.func @_spatial_softmax_kernel(%arg0: i32, %arg1: memref<1xf32, #tpu.memory_space<smem>>, %arg2: memref<8x256xf32, #tpu.memory_space<vmem>>, %arg3: memref<256x128xf32, #tpu.memory_space<vmem>>, %arg4: memref<8x2xf32, #tpu.memory_space<vmem>>) attributes {dimension_semantics = [#tpu.dimension_semantics<parallel>], iteration_bounds = array<i64: 1>, scalar_prefetch = 0 : i64, scratch_operands = 0 : i64, tpu.core_type = #tpu.core_type<tc>, window_params = [{transform_indices = @transform_0, window_bounds = array<i64: 1>}, {transform_indices = @transform_1, window_bounds = array<i64: 8, 256>}, {pipeline_mode = #tpu.pipeline_mode<synchronous>, transform_indices = @transform_2, window_bounds = array<i64: 256, 128>}, {transform_indices = @transform_3, window_bounds = array<i64: 8, 2>}]} {
    %c0 = arith.constant 0 : index
    %0 = memref.load %arg1[%c0] : memref<1xf32, #tpu.memory_space<smem>>
    %cst = arith.constant 1.000000e+00 : f32
    %1 = arith.divf %cst, %0 : f32
    %c0_0 = arith.constant 0 : index
    %c0_1 = arith.constant 0 : index
    %2 = vector.load %arg2[%c0_0, %c0_1] : memref<8x256xf32, #tpu.memory_space<vmem>>, vector<8x256xf32>
    %cst_2 = arith.constant dense<0xFF800000> : vector<8xf32>
    %3 = vector.multi_reduction <maximumf>, %2, %cst_2 [1] : vector<8x256xf32> to vector<8xf32>
    %4 = vector.shape_cast %3 : vector<8xf32> to vector<8x1xf32>
    %5 = vector.broadcast %4 : vector<8x1xf32> to vector<8x256xf32>
    %6 = arith.subf %2, %5 : vector<8x256xf32>
    %7 = vector.broadcast %1 : f32 to vector<8x256xf32>
    %8 = arith.mulf %6, %7 : vector<8x256xf32>
    %9 = math.exp %8 : vector<8x256xf32>
    %c0_3 = arith.constant 0 : index
    %c0_4 = arith.constant 0 : index
    %10 = vector.load %arg3[%c0_3, %c0_4] : memref<256x128xf32, #tpu.memory_space<vmem>>, vector<256x128xf32>
    %cst_5 = arith.constant dense<0.000000e+00> : vector<8x128xf32>
    %11 = tpu.matmul %9, %10, %cst_5 {dimension_numbers = #tpu.dot_dimension_numbers<[1], [0], [0], [1], [0, 0, 1, 1], [], []>} : vector<8x256xf32>, vector<256x128xf32>, vector<8x128xf32> -> vector<8x128xf32>
    %12 = vector.extract_strided_slice %11 {offsets = [0, 2], sizes = [8, 1], strides = [1, 1]} : vector<8x128xf32> to vector<8x1xf32>
    %13 = tpu.reciprocal %12 : vector<8x1xf32> -> vector<8x1xf32>
    %14 = vector.extract_strided_slice %11 {offsets = [0, 0], sizes = [8, 2], strides = [1, 1]} : vector<8x128xf32> to vector<8x2xf32>
    %15 = vector.broadcast %13 : vector<8x1xf32> to vector<8x2xf32>
    %16 = arith.mulf %14, %15 : vector<8x2xf32>
    %c0_6 = arith.constant 0 : index
    %c0_7 = arith.constant 0 : index
    %17 = vector.load %arg4[%c0_6, %c0_7] : memref<8x2xf32, #tpu.memory_space<vmem>>, vector<8x2xf32>
    tpu.vector_store %arg4[%c0_6, %c0_7], %16 {strides = array<i32>} : memref<8x2xf32, #tpu.memory_space<vmem>>, vector<8x2xf32>,
    return
  }
  func.func @transform_0(%arg0: i32) -> i32 {
    %c0_i32 = arith.constant 0 : i32
    %c0_i32_0 = arith.constant 0 : i32
    return %c0_i32 : i32
  }
  func.func @transform_1(%arg0: i32) -> (i32, i32) {
    %c0_i32 = arith.constant 0 : i32
    %c0_i32_0 = arith.constant 0 : i32
    return %arg0, %c0_i32 : i32, i32
  }
  func.func @transform_2(%arg0: i32) -> (i32, i32) {
    %c0_i32 = arith.constant 0 : i32
    %c0_i32_0 = arith.constant 0 : i32
    %c0_i32_1 = arith.constant 0 : i32
    return %c0_i32, %c0_i32_0 : i32, i32
  }
  func.func @transform_3(%arg0: i32) -> (i32, i32) {
    %c0_i32 = arith.constant 0 : i32
    %c0_i32_0 = arith.constant 0 : i32
    return %arg0, %c0_i32 : i32, i32
  }
}

</mosaic_0001>

<llo_original>
// kernel: tpu_custom_call.1
$region0: #{tpu_custom_call.1}
  #allocation0 [shape = 'u32[]', space=smem, size = 0x4, offset = 0x4, fixed_abs, tag = 'smem constant byte address 0x4 - core index']
  #allocation1 [shape = 'u32[144,128]{1,0:T(1,128)}', space=vmem, size = 0x12000, scoped, tag = 'internal scratch']
  #allocation2 [shape = 'f32[1]{0:T(128)S(6)}', space=smem, size = 0x200, scoped, tag = 'scoped memory for tpu_custom_call.1']
  %s0 = inlined_call_operand.<no memory space> [shape: f32[1], index: 0, kind: input, shape index: {}]
  %s1 = inlined_call_operand.hbm [shape: f32[8,256], index: 1, kind: input, shape index: {}]
  %s2 = inlined_call_operand.hbm [shape: f32[256,128], index: 2, kind: input, shape index: {}]
  %s3 = inlined_call_operand.vmem [shape: f32[8,2], index: 3, kind: output, shape index: {}]
  %s4 = sld [smem:[#allocation0]]
  $region30: #{tpu_custom_call.1} parent=0
    _
  %s6 = ssub.s32 1, %s4
  %s7 = scalar_select 0, %s6, %s4
  %8 = sst [smem:[#allocation2]] %s0
  $region1: #{tpu_custom_call.1} parent=0
    #allocation3 [shape = 'u8[8192]{0}', space=vmem, size = 0x2000, scoped, tag = 'input window, operand 1, single buffered']
    #allocation4 [shape = 's32[1]{0}', space=sflag, size = 0x4, scoped, tag = 'scoped memory for tpu_custom_call.1']
    #allocation5 [shape = 'u8[131072]{0}', space=vmem, size = 0x20000, scoped, tag = 'input window, operand 2, single buffered']
    #allocation6 [shape = 's32[1]{0}', space=sflag, size = 0x4, scoped, tag = 'scoped memory for tpu_custom_call.1']
    %9 = vsyncpa [#allocation4], 0
    %10 = vsyncpa [#allocation6], 0
    // Predicated region
    $region2: #{tpu_custom_call.1} parent=1 // pred_check
      _
    $region3: #{tpu_custom_call.1} parent=1 // pred_check_branch
      %12 = sbr.rel (0) target = $region5
    $region4: #{tpu_custom_call.1} parent=1 // pred_region
      _
    $region5: #{tpu_custom_call.1} parent=1 // pred_fallthru
      _
    // Predicated region
    $region6: #{tpu_custom_call.1} parent=1 // pred_check
      _
    $region7: #{tpu_custom_call.1} parent=1 // pred_check_branch
      %14 = sbr.rel (0) target = $region9
    $region8: #{tpu_custom_call.1} parent=1 // pred_region
      %s16 = ssub.s32 256, 256
      %17 = vsyncadd [#allocation4], %s16
      %s19 = sshll.u32 [#allocation3], 4
      %s20 = int_to_ptr.vmem [resolvable:$true] %s19
      %22 = dma.hbm_to_vmem [thread:$0]  %s1, 256, %s20, [#allocation4]
    $region9: #{tpu_custom_call.1} parent=1 // pred_fallthru
      _
    // Predicated region
    $region10: #{tpu_custom_call.1} parent=1 // pred_check
      _
    $region11: #{tpu_custom_call.1} parent=1 // pred_check_branch
      %24 = sbr.rel (0) target = $region13
    $region12: #{tpu_custom_call.1} parent=1 // pred_region
      %s26 = ssub.s32 4096, 4096
      %27 = vsyncadd [#allocation6], %s26
      %s28 = sshll.u32 [#allocation5], 4
      %s29 = int_to_ptr.vmem [resolvable:$true] %s28
      %34 = dma.hbm_to_vmem [thread:$0]  %s2, 4096, %s29, [#allocation6], 128, 128, 8
    $region13: #{tpu_custom_call.1} parent=1 // pred_fallthru
      _
    // Predicated region
    $region14: #{tpu_custom_call.1} parent=1 // pred_check
      _
    $region15: #{tpu_custom_call.1} parent=1 // pred_check_branch
      %36 = sbr.rel (0) target = $region17
    $region16: #{tpu_custom_call.1} parent=1 // pred_region
      %37 = dma.done [#allocation4], 256
    $region17: #{tpu_custom_call.1} parent=1 // pred_fallthru
      _
    // Predicated region
    $region18: #{tpu_custom_call.1} parent=1 // pred_check
      _
    $region19: #{tpu_custom_call.1} parent=1 // pred_check_branch
      %39 = sbr.rel (0) target = $region21
    $region20: #{tpu_custom_call.1} parent=1 // pred_region
      %40 = dma.done [#allocation6], 4096
    $region21: #{tpu_custom_call.1} parent=1 // pred_fallthru
      _
    %s41 = sld [smem:[#allocation2]]
    %v42 = vstv %s41
    %v43 = vrcp.pop %v42
    %s44 = vtos %v43
    %v45 = vld [vmem:[#allocation3] sm:$0xff]
    %v46 = vld [vmem:[#allocation3 + $0x8] sm:$0xff]
    %v47 = vmax.f32 %v45, %v46
    %48 = vmax.xlane.f32.xlu0 %v47
    %v49 = vpop.xlane.xlu0 %48
    %v50 = vsub.f32 %v45, %v49
    %v51 = vsub.f32 %v46, %v49
    %v52 = vstv %s44
    %v53 = vmul.f32 %v50, %v52
    %v54 = vmul.f32 %v51, %v52
    %v55 = vmul.f32 %v53, 1.442695
    %v56 = vpow.pop %v55
    %v57 = vmul.f32 %v54, 1.442695
    %v58 = vpow.pop %v57
    %v59 = vld [vmem:[#allocation5] sm:$0xff]
    %v60 = vld [vmem:[#allocation5 + $0x8] sm:$0xff]
    %v61 = vld [vmem:[#allocation5 + $0x10] sm:$0xff]
    %v62 = vld [vmem:[#allocation5 + $0x18] sm:$0xff]
    %v63 = vld [vmem:[#allocation5 + $0x20] sm:$0xff]
    %v64 = vld [vmem:[#allocation5 + $0x28] sm:$0xff]
    %v65 = vld [vmem:[#allocation5 + $0x30] sm:$0xff]
    %v66 = vld [vmem:[#allocation5 + $0x38] sm:$0xff]
    %v67 = vld [vmem:[#allocation5 + $0x40] sm:$0xff]
    %v68 = vld [vmem:[#allocation5 + $0x48] sm:$0xff]
    %v69 = vld [vmem:[#allocation5 + $0x50] sm:$0xff]
    %v70 = vld [vmem:[#allocation5 + $0x58] sm:$0xff]
    %v71 = vld [vmem:[#allocation5 + $0x60] sm:$0xff]
    %v72 = vld [vmem:[#allocation5 + $0x68] sm:$0xff]
    %v73 = vld [vmem:[#allocation5 + $0x70] sm:$0xff]
    %v74 = vld [vmem:[#allocation5 + $0x78] sm:$0xff]
    %v75 = vld [vmem:[#allocation5 + $0x80] sm:$0xff]
    %v76 = vld [vmem:[#allocation5 + $0x88] sm:$0xff]
    %v77 = vld [vmem:[#allocation5 + $0x90] sm:$0xff]
    %v78 = vld [vmem:[#allocation5 + $0x98] sm:$0xff]
    %v79 = vld [vmem:[#allocation5 + $0xa0] sm:$0xff]
    %v80 = vld [vmem:[#allocation5 + $0xa8] sm:$0xff]
    %v81 = vld [vmem:[#allocation5 + $0xb0] sm:$0xff]
    %v82 = vld [vmem:[#allocation5 + $0xb8] sm:$0xff]
    %v83 = vld [vmem:[#allocation5 + $0xc0] sm:$0xff]
    %v84 = vld [vmem:[#allocation5 + $0xc8] sm:$0xff]
    %v85 = vld [vmem:[#allocation5 + $0xd0] sm:$0xff]
    %v86 = vld [vmem:[#allocation5 + $0xd8] sm:$0xff]
    %v87 = vld [vmem:[#allocation5 + $0xe0] sm:$0xff]
    %v88 = vld [vmem:[#allocation5 + $0xe8] sm:$0xff]
    %v89 = vld [vmem:[#allocation5 + $0xf0] sm:$0xff]
    %v90 = vld [vmem:[#allocation5 + $0xf8] sm:$0xff]
    %91 = vmatprep.subr.mxu0 0.0
    %92 = vmatpush1.msra.mxu0 %v59
    %93 = vmatprep.subr.mxu0 0.0
    %94 = vmatpush1.msra.mxu0 %v60
    %95 = vmatprep.subr.mxu0 0.0
    %96 = vmatpush1.msra.mxu0 %v61
    %97 = vmatprep.subr.mxu0 0.0
    %98 = vmatpush1.msra.mxu0 %v62
    %99 = vmatprep.subr.mxu0 0.0
    %100 = vmatpush1.msra.mxu0 %v63
    %101 = vmatprep.subr.mxu0 0.0
    %102 = vmatpush1.msra.mxu0 %v64
    %103 = vmatprep.subr.mxu0 0.0
    %104 = vmatpush1.msra.mxu0 %v65
    %105 = vmatprep.subr.mxu0 0.0
    %106 = vmatpush1.msra.mxu0 %v66
    %107 = vmatprep.subr.mxu0 0.0
    %108 = vmatpush1.msra.mxu0 %v67
    %109 = vmatprep.subr.mxu0 0.0
    %110 = vmatpush1.msra.mxu0 %v68
    %111 = vmatprep.subr.mxu0 0.0
    %112 = vmatpush1.msra.mxu0 %v69
    %113 = vmatprep.subr.mxu0 0.0
    %114 = vmatpush1.msra.mxu0 %v70
    %115 = vmatprep.subr.mxu0 0.0
    %116 = vmatpush1.msra.mxu0 %v71
    %117 = vmatprep.subr.mxu0 0.0
    %118 = vmatpush1.msra.mxu0 %v72
    %119 = vmatprep.subr.mxu0 0.0
    %120 = vmatpush1.msra.mxu0 %v73
    %121 = vmatprep.subr.mxu0 0.0
    %122 = vmatpush1.msra.mxu0 %v74
    %123 = vmatprep.subr.mxu0 0.0
    %124 = vmatpush1.msra.mxu0 %v75
    %125 = vmatprep.subr.mxu0 0.0
    %126 = vmatpush1.msra.mxu0 %v76
    %127 = vmatprep.subr.mxu0 0.0
    %128 = vmatpush1.msra.mxu0 %v77
    %129 = vmatprep.subr.mxu0 0.0
    %130 = vmatpush1.msra.mxu0 %v78
    %131 = vmatprep.subr.mxu0 0.0
    %132 = vmatpush1.msra.mxu0 %v79
    %133 = vmatprep.subr.mxu0 0.0
    %134 = vmatpush1.msra.mxu0 %v80
    %135 = vmatprep.subr.mxu0 0.0
    %136 = vmatpush1.msra.mxu0 %v81
    %137 = vmatprep.subr.mxu0 0.0
    %138 = vmatpush1.msra.mxu0 %v82
    %139 = vmatprep.subr.mxu0 0.0
    %140 = vmatpush1.msra.mxu0 %v83
    %141 = vmatprep.subr.mxu0 0.0
    %142 = vmatpush1.msra.mxu0 %v84
    %143 = vmatprep.subr.mxu0 0.0
    %144 = vmatpush1.msra.mxu0 %v85
    %145 = vmatprep.subr.mxu0 0.0
    %146 = vmatpush1.msra.mxu0 %v86
    %147 = vmatprep.subr.mxu0 0.0
    %148 = vmatpush1.msra.mxu0 %v87
    %149 = vmatprep.subr.mxu0 0.0
    %150 = vmatpush1.msra.mxu0 %v88
    %151 = vmatprep.subr.mxu0 0.0
    %152 = vmatpush1.msra.mxu0 %v89
    %153 = vmatprep.subr.mxu0 0.0
    %154 = vmatpush1.msra.mxu0 %v90
    %155 = vmatprep.mubr.f32.mxu0 %v58
    %156 = vmatmul.mubr.f32.gmra.mrb[0].mxu0 %v56
    %v157 = vpop.f32.mrb[0].mxu0
    %v158 = vadd.f32 0.0, %v157
    %v159 = vpop.f32.mrb[0].mxu0
    %160 = vdwg.mxu0
    %v161 = vrcp.pop %v158
    %163 = vset.pattern.permute.xlu0 2
    %164 = vperm.xlu0 %163, %v161
    %v165 = vpop.permute.xlu0 %164
    %v167 = vmul.f32 %v158, %v165
    %vm168 = vcmask 15360
    %169 = vst.msk [vmem:[%s3] sm:$0xff] %vm168, %v167
    // Predicated region
    $region22: #{tpu_custom_call.1} parent=1 // pred_check
      _
    $region23: #{tpu_custom_call.1} parent=1 // pred_check_branch
      %171 = sbr.rel (0) target = $region25
    $region24: #{tpu_custom_call.1} parent=1 // pred_region
      _
    $region25: #{tpu_custom_call.1} parent=1 // pred_fallthru
      _
    // Predicated region
    $region26: #{tpu_custom_call.1} parent=1 // pred_check
      _
    $region27: #{tpu_custom_call.1} parent=1 // pred_check_branch
      %173 = sbr.rel (0) target = $region29
    $region28: #{tpu_custom_call.1} parent=1 // pred_region
      _
    $region29: #{tpu_custom_call.1} parent=1 // pred_fallthru
      _
    %174 = vsyncpa [#allocation4], 1
    %175 = vsyncpa [#allocation6], 1

</llo_original>
